<compile_context>
chip_gen: v7x
topology: tpu7x:2x2x1
jax: 0.10.0
libtpu: 0.0.40
codegen_flags: <defaults>
</compile_context>

<pallas_src>
import functools

import jax
import jax.numpy as jnp
from jax.experimental import pallas as pl
from jax.experimental.pallas import tpu as pltpu


# ----------------------------------------------------------------------------- kernels
def _normalize_kernel_const(x_ref, o_ref, *, scale, bias):
    # scale/bias are compile-time Python floats (weak-typed): the multiply-add
    # stays in the input dtype (f32 stays f32; bf16 stays bf16).
    o_ref[...] = (x_ref[...] * scale + bias).astype(o_ref.dtype)


def _normalize_kernel_smem(scale_ref, bias_ref, x_ref, o_ref):
    # Traced-scalar fallback: f32 scale/bias live in SMEM, widen-compute-narrow.
    x = x_ref[...].astype(jnp.float32)
    o_ref[...] = (x * scale_ref[0] + bias_ref[0]).astype(o_ref.dtype)


# ----------------------------------------------------------------------------- helpers
def _as_static_float(v):
    """Return a Python float if `v` is statically known, else None (traced)."""
    try:
        return float(v)
    except Exception:  # ConcretizationTypeError under jit tracing
        return None


def _vmem_capacity_bytes() -> int:
    try:
        return int(pltpu.get_tpu_info().vmem_capacity_bytes)
    except Exception:
        return 64 << 20  # conservative fallback (v7x per-TC VMEM)


def _sublane_multiple(dtype) -> int:
    # Packed-sublane minimum: 8 rows for 4-byte dtypes, 16 for 2-byte, 32 for 1-byte.
    return max(8, 32 // jnp.dtype(dtype).itemsize)


# ----------------------------------------------------------------------------- wrapper
def normalize_forward(x, mean, std, *, target_block_bytes=None):
    """Pallas equivalent of Normalize.forward (i.e. _standardize).

    Works for any-rank floating input; mean/std may be Python floats (folded
    into the kernel as constants) or traced scalars (SMEM path).
    """
    orig_shape = x.shape
    orig_dtype = x.dtype
    assert jnp.issubdtype(orig_dtype, jnp.floating), (
        "normalize_forward expects a floating-point input")
    total = int(x.size)

    # --- scale/bias: fold to constants when statically known ------------------
    mean_s = _as_static_float(mean)
    std_s = _as_static_float(std)
    static_scalars = mean_s is not None and std_s is not None
    if static_scalars:
        scale = 1.0 / std_s
        bias = -mean_s * scale
    else:
        scale = jnp.asarray(1.0, jnp.float32) / jnp.asarray(std, jnp.float32)
        bias = -jnp.asarray(mean, jnp.float32) * scale

    # --- Lane-dense 2D slab: cols chosen so it divides `total` when possible --
    cols = None
    for c in (1024, 512, 256, 128):
        if total % c == 0:
            cols = c
            break
    if cols is None:
        cols = 128  # run kernel on the divisible prefix, tail (<128 elems) in jnp
    main_total = (total // cols) * cols
    tail_len = total - main_total
    rows = main_total // cols

    if rows == 0:
        # Empty or <128-element input: one tiny fused jnp expression.
        return (x * scale + bias).astype(orig_dtype)

    # --- Block sizing from VMEM capacity --------------------------------------
    vmem_cap = _vmem_capacity_bytes()
    if target_block_bytes is None:
        # Double-buffered working set = 2 bufs x (in-block + out-block) = 4x block.
        # 8 MiB blocks -> 32 MiB, safe on v7x (64 MiB) and v5e/v6e (128 MiB).
        target_block_bytes = max(1 << 20, min(8 << 20, vmem_cap // 8))
    vmem_limit_bytes = min(vmem_cap * 3 // 4,
                           max(32 << 20, 4 * target_block_bytes + (8 << 20)))

    itemsize = jnp.dtype(orig_dtype).itemsize
    sublane = _sublane_multiple(orig_dtype)
    bytes_per_row = cols * itemsize
    budget_rows = max(sublane,
                      (target_block_bytes // bytes_per_row) // sublane * sublane)

    # Keep >= MIN_BLOCKS grid steps when a sublane-aligned split is possible so
    # the pipeline overlaps DMA-in/compute/DMA-out and v7x's 2 TCs share work.
    MIN_BLOCKS = 8
    split_rows = (rows // MIN_BLOCKS) // sublane * sublane
    if split_rows >= sublane:
        tile_rows = min(budget_rows, split_rows)
    elif budget_rows < rows:
        tile_rows = budget_rows
    else:
        tile_rows = rows  # tiny slab: single full-dim block (always legal)
    grid = (pl.cdiv(rows, tile_rows),)  # ragged last block handled by Pallas

    # --- Build the 2D view (fast path is copy-free) ---------------------------
    if tail_len == 0:
        x2d = jnp.reshape(x, (rows, cols))           # metadata-only reshape
        flat = None
    else:
        flat = jnp.reshape(x, (-1,))
        x2d = jnp.reshape(flat[:main_total], (rows, cols))

    block_spec = pl.BlockSpec((tile_rows, cols), lambda i: (i, 0))
    compiler_params = pltpu.CompilerParams(
        dimension_semantics=("parallel",),
        vmem_limit_bytes=vmem_limit_bytes,
    )

    if static_scalars:
        out2d = pl.pallas_call(
            functools.partial(_normalize_kernel_const, scale=scale, bias=bias),
            out_shape=jax.ShapeDtypeStruct((rows, cols), orig_dtype),
            grid=grid,
            in_specs=[block_spec],
            out_specs=block_spec,
            compiler_params=compiler_params,
        )(x2d)
    else:
        scale_arr = jnp.reshape(scale, (1,)).astype(jnp.float32)
        bias_arr = jnp.reshape(bias, (1,)).astype(jnp.float32)
        out2d = pl.pallas_call(
            _normalize_kernel_smem,
            out_shape=jax.ShapeDtypeStruct((rows, cols), orig_dtype),
            grid=grid,
            in_specs=[
                pl.BlockSpec(memory_space=pltpu.SMEM),   # scale
                pl.BlockSpec(memory_space=pltpu.SMEM),   # bias
                block_spec,                              # x tile
            ],
            out_specs=block_spec,
            compiler_params=compiler_params,
        )(scale_arr, bias_arr, x2d)

    if tail_len == 0:
        return jnp.reshape(out2d, orig_shape)

    # Rare remainder path: <128-element tail computed with a tiny fused jnp op.
    tail_out = (flat[main_total:] * scale + bias).astype(orig_dtype)
    out_flat = jnp.concatenate([jnp.reshape(out2d, (-1,)), tail_out])
    return jnp.reshape(out_flat, orig_shape)


# TODO(synk): inverse_normalize / _min_max_(de)normalize are not exercised by
# forward(); they would be trivial sibling kernels (x*std+mean, etc.) if needed.


if __name__ == "__main__":
    mean, std = 1.5, 3.0
    _max, _min = 10.0, -10.0  # buffers exist in the module but unused by forward()

    norm = jax.jit(lambda a: normalize_forward(a, mean, std))

    # 1) NCHW conv-style tensor: batch=2, channels=4, spatial 16x16 (f32).
    x = jax.random.normal(jax.random.PRNGKey(0), (2, 4, 16, 16), jnp.float32) * 3.0 + 1.5
    y = jax.block_until_ready(norm(x))
    assert y.shape == x.shape and y.dtype == x.dtype
    assert jnp.allclose(y, (x - mean) / std, atol=1e-5, rtol=1e-5)

    # 2) Element count not divisible by 128 -> fused-jnp tail path (no padding).
    x2 = jax.random.normal(jax.random.PRNGKey(1), (3, 5, 7), jnp.float32)
    y2 = jax.block_until_ready(norm(x2))
    assert y2.shape == x2.shape
    assert jnp.allclose(y2, (x2 - mean) / std, atol=1e-5, rtol=1e-5)

    # 3) Multi-block grid with a ragged last block (rows=129, tile_rows=16).
    x3 = jax.random.normal(jax.random.PRNGKey(2), (8, 8, 8, 129), jnp.float32)
    y3 = jax.block_until_ready(norm(x3))
    assert jnp.allclose(y3, (x3 - mean) / std, atol=1e-5, rtol=1e-5)

    # 4) bf16 input: compute stays in bf16, multi-block grid, sublane=16.
    x4 = (jax.random.normal(jax.random.PRNGKey(3), (4, 32, 1024), jnp.float32) * 3.0
          + 1.5).astype(jnp.bfloat16)
    y4 = jax.block_until_ready(norm(x4))
    assert y4.dtype == jnp.bfloat16
    assert jnp.allclose(y4.astype(jnp.float32),
                        (x4.astype(jnp.float32) - mean) / std,
                        atol=5e-2, rtol=5e-2)

    # 5) Traced (non-static) mean/std -> SMEM-scalar kernel path under jit.
    y5 = jax.block_until_ready(
        jax.jit(normalize_forward)(x, jnp.float32(mean), jnp.float32(std)))
    assert jnp.allclose(y5, (x - mean) / std, atol=1e-5, rtol=1e-5)

    print("KERNEL_OK")
</pallas_src>

<mosaic_0001>
module attributes {stable_mosaic.version = 11 : i64} {
  func.func @_normalize_kernel_const(%arg0: i32, %arg1: memref<2x1024xf32, #tpu.memory_space<vmem>>, %arg2: memref<2x1024xf32, #tpu.memory_space<vmem>>) attributes {dimension_semantics = [#tpu.dimension_semantics<parallel>], iteration_bounds = array<i64: 1>, scalar_prefetch = 0 : i64, scratch_operands = 0 : i64, tpu.core_type = #tpu.core_type<tc>, window_params = [{transform_indices = @transform_0, window_bounds = array<i64: 2, 1024>}, {transform_indices = @transform_1, window_bounds = array<i64: 2, 1024>}]} {
    %c0 = arith.constant 0 : index
    %c0_0 = arith.constant 0 : index
    %0 = vector.load %arg1[%c0, %c0_0] : memref<2x1024xf32, #tpu.memory_space<vmem>>, vector<2x1024xf32>
    %cst = arith.constant 0.333333343 : f32
    %1 = vector.broadcast %cst : f32 to vector<2x1024xf32>
    %2 = arith.mulf %0, %1 : vector<2x1024xf32>
    %cst_1 = arith.constant -5.000000e-01 : f32
    %3 = vector.broadcast %cst_1 : f32 to vector<2x1024xf32>
    %4 = arith.addf %2, %3 : vector<2x1024xf32>
    %c0_2 = arith.constant 0 : index
    %c0_3 = arith.constant 0 : index
    %5 = vector.load %arg2[%c0_2, %c0_3] : memref<2x1024xf32, #tpu.memory_space<vmem>>, vector<2x1024xf32>
    tpu.vector_store %arg2[%c0_2, %c0_3], %4 {strides = array<i32>} : memref<2x1024xf32, #tpu.memory_space<vmem>>, vector<2x1024xf32>,
    return
  }
  func.func @transform_0(%arg0: i32) -> (i32, i32) {
    %c0_i32 = arith.constant 0 : i32
    %c0_i32_0 = arith.constant 0 : i32
    return %arg0, %c0_i32 : i32, i32
  }
  func.func @transform_1(%arg0: i32) -> (i32, i32) {
    %c0_i32 = arith.constant 0 : i32
    %c0_i32_0 = arith.constant 0 : i32
    return %arg0, %c0_i32 : i32, i32
  }
}

</mosaic_0001>

<llo_original>
// kernel: _lambda_.1
$region0: #{_lambda_.1}
  #allocation0 [shape = 'u32[]', space=smem, size = 0x4, offset = 0x4, fixed_abs, tag = 'smem constant byte address 0x4 - core index']
  #allocation1 [shape = 'u32[144,128]{1,0:T(1,128)}', space=vmem, size = 0x12000, scoped, tag = 'internal scratch']
  %s0 = inlined_call_operand.vmem [shape: f32[2,1024], index: 0, kind: input, shape index: {}]
  %s1 = inlined_call_operand.vmem [shape: f32[2,1024], index: 1, kind: output, shape index: {}]
  %s2 = sld [smem:[#allocation0]]
  $region14: #{_lambda_.1} parent=0
    _
  %s4 = ssub.s32 1, %s2
  %s5 = scalar_select 0, %s4, %s2
  // Predicated region
  $region2: #{_lambda_.1} parent=0 // pred_check
    _
  $region3: #{_lambda_.1} parent=0 // pred_check_branch
    %7 = sbr.rel (0) target = $region5
  $region4: #{_lambda_.1} parent=0 // pred_region
    _
  $region5: #{_lambda_.1} parent=0 // pred_fallthru
    _
  %v8 = vld [vmem:[%s0] sm:$0xff]
  %v9 = vld [vmem:[%s0 + $0x8] sm:$0xff]
  %v10 = vmul.f32 %v8, 0.33333334
  %v11 = vmul.f32 %v9, 0.33333334
  %v12 = vadd.f32 %v10, -0.5
  %v13 = vadd.f32 %v11, -0.5
  %14 = vst [vmem:[%s1] sm:$0xff] %v12
  %15 = vst [vmem:[%s1 + $0x8] sm:$0xff] %v13
  // Predicated region
  $region6: #{_lambda_.1} parent=0 // pred_check
    _
  $region7: #{_lambda_.1} parent=0 // pred_check_branch
    %17 = sbr.rel (0) target = $region9
  $region8: #{_lambda_.1} parent=0 // pred_region
    _
  $region9: #{_lambda_.1} parent=0 // pred_fallthru
    _
  // Predicated region
  $region10: #{_lambda_.1} parent=0 // pred_check
    _
  $region11: #{_lambda_.1} parent=0 // pred_check_branch
    %19 = sbr.rel (0) target = $region13
  $region12: #{_lambda_.1} parent=0 // pred_region
    _
  $region13: #{_lambda_.1} parent=0 // pred_fallthru
    _

</llo_original>
